<compile_context>
chip_gen: v7x
topology: tpu7x:2x2x1
jax: 0.10.0
libtpu: 0.0.40
codegen_flags: <defaults>
</compile_context>

<pallas_src>
import functools

import jax
import jax.numpy as jnp
from jax.experimental import pallas as pl
from jax.experimental.pallas import tpu as pltpu


def _wce_kernel(w_ref, logits_ref, tgt_ref, loss_ref, wsum_ref, *,
                ignore_index, hw, tile_hw, ptiles_per_chunk, ragged):
    p = pl.program_id(2)

    # init per-(batch, chunk) lane accumulators on the first pixel tile
    @pl.when(p == 0)
    def _():
        loss_ref[...] = jnp.zeros_like(loss_ref)
        wsum_ref[...] = jnp.zeros_like(wsum_ref)

    logits = logits_ref[...].astype(jnp.float32)       # (1, C, T) classes on sublanes
    tgt = tgt_ref[...]                                  # (1, 1, T) int32, pixels on lanes
    w = w_ref[...].astype(jnp.float32)                  # (1, C, 1) class weights

    # numerically stable log-softmax over the class (sublane) axis
    m = jnp.max(logits, axis=1, keepdims=True)                               # (1, 1, T)
    lse = jnp.log(jnp.sum(jnp.exp(logits - m), axis=1, keepdims=True)) + m   # (1, 1, T)

    # single one-hot compare (broadcasted_iota -> viota), reused for both
    # gathers; logits tile is read exactly once (no dynamic gather on TPU).
    class_ids = jax.lax.broadcasted_iota(jnp.int32, logits.shape, 1)         # (1, C, T)
    onehot = class_ids == tgt                                                # (1, C, T)
    tgt_logit = jnp.sum(jnp.where(onehot, logits, 0.0), axis=1, keepdims=True)  # (1,1,T)
    w_pix = jnp.sum(jnp.where(onehot, w, 0.0), axis=1, keepdims=True)           # (1,1,T)

    nll = lse - tgt_logit                                                    # (1, 1, T)

    valid = tgt != ignore_index
    contrib_loss = jnp.where(valid, w_pix * nll, 0.0)
    contrib_w = jnp.where(valid, w_pix, 0.0)

    if ragged:  # static: only emit the edge-mask machinery when it can trigger
        c = pl.program_id(0)
        g = c * ptiles_per_chunk + p            # global pixel-tile index (unclamped)
        is_edge = (g + 1) * tile_hw > hw        # ragged last tile or fully OOB tile

        @pl.when(jnp.logical_not(is_edge))
        def _():  # fast path: no per-lane range mask
            loss_ref[...] += contrib_loss
            wsum_ref[...] += contrib_w

        @pl.when(is_edge)
        def _():  # edge path: mask lanes beyond the logical HW extent
            lane_idx = jax.lax.broadcasted_iota(jnp.int32, tgt.shape, 2)
            in_range = (g * tile_hw + lane_idx) < hw
            loss_ref[...] += jnp.where(in_range, contrib_loss, 0.0)
            wsum_ref[...] += jnp.where(in_range, contrib_w, 0.0)
    else:
        loss_ref[...] += contrib_loss
        wsum_ref[...] += contrib_w


def _pick_tile(hw, c, *, max_tile=65536, max_f32_bytes=3 * 1024 * 1024):
    """Lane-dense pixel tile: multiple of 128 (or full extent).

    Budgeted against the f32 in-kernel working set (C * tile * 4 bytes) so the
    double-buffered inputs plus f32 temporaries stay ~20 MiB worst case — under
    the raised vmem limit on every generation (v5e/v6e 128 MiB, v7x 64 MiB)."""
    budget = max(128, ((max_f32_bytes // max(c * 4, 1)) // 128) * 128)
    tile = min(max_tile, budget)
    if hw <= tile:
        return hw            # full extent is always a legal block shape
    return tile              # multiple of 128; ragged tail masked in-kernel


def weighted_cross_entropy(logits_nchw, target, class_weights, ignore_index, *,
                           max_tile=65536):
    """Matches torch.nn.CrossEntropyLoss(weight=class_weights, ignore_index=...)
    with 'mean' reduction on NCHW logits / NHW integer targets."""
    N, C, H, W = logits_nchw.shape
    HW = H * W

    # free reshapes only — keep native dtype (bf16 ok), classes on sublanes,
    # pixels on lanes
    x = logits_nchw.reshape(N, C, HW)
    t = target.reshape(N, 1, HW).astype(jnp.int32)
    w = jnp.asarray(class_weights, jnp.float32).reshape(1, C, 1)

    tile_hw = _pick_tile(HW, C, max_tile=max_tile)
    n_ptiles = pl.cdiv(HW, tile_hw)
    # leading "parallel" pixel-chunk axis so both v7x TensorCores get work even
    # when N == 1 (no effect on single-TC v5e/v6e)
    n_chunks = 2 if n_ptiles >= 2 else 1
    ppc = pl.cdiv(n_ptiles, n_chunks)
    ragged = (n_chunks * ppc * tile_hw) != HW

    kernel = functools.partial(_wce_kernel, ignore_index=ignore_index, hw=HW,
                               tile_hw=tile_hw, ptiles_per_chunk=ppc,
                               ragged=ragged)

    def pix_map(c, n, p):
        g = c * ppc + p
        if n_ptiles > 1:
            # clamp so fully-out-of-range tiles DMA an in-bounds block; their
            # contribution is zeroed in-kernel by the lane range mask
            g = jnp.minimum(g, n_ptiles - 1)
        return (n, 0, g)

    cost = pl.CostEstimate(
        flops=7 * N * C * HW,
        transcendentals=N * C * HW,
        bytes_accessed=(x.size * x.dtype.itemsize + t.size * 4 + w.size * 4
                        + 2 * N * n_chunks * tile_hw * 4))

    loss_part, w_part = pl.pallas_call(
        kernel,
        out_shape=(jax.ShapeDtypeStruct((N, n_chunks, tile_hw), jnp.float32),
                   jax.ShapeDtypeStruct((N, n_chunks, tile_hw), jnp.float32)),
        grid_spec=pltpu.PrefetchScalarGridSpec(
            num_scalar_prefetch=0,
            grid=(n_chunks, N, ppc),
            in_specs=[
                pl.BlockSpec((1, C, 1), lambda c, n, p: (0, 0, 0)),   # class weights
                pl.BlockSpec((1, C, tile_hw), pix_map),               # logits tile
                pl.BlockSpec((1, 1, tile_hw), pix_map),               # target tile
            ],
            out_specs=[
                pl.BlockSpec((1, 1, tile_hw), lambda c, n, p: (n, c, 0)),  # loss acc
                pl.BlockSpec((1, 1, tile_hw), lambda c, n, p: (n, c, 0)),  # weight acc
            ],
        ),
        compiler_params=pltpu.CompilerParams(
            dimension_semantics=("parallel", "parallel", "arbitrary"),
            vmem_limit_bytes=48 * 1024 * 1024),
        cost_estimate=cost,
    )(w, x, t)

    # PyTorch 'mean' with weights: sum(w[t]*nll) / sum(w[t]) over non-ignored pixels
    return jnp.sum(loss_part) / jnp.sum(w_part)


def _reference(logits_nchw, target, class_weights, ignore_index):
    # pure-JAX reference for validation
    N, C, H, W = logits_nchw.shape
    x = jnp.transpose(logits_nchw, (0, 2, 3, 1)).reshape(-1, C).astype(jnp.float32)
    t = target.reshape(-1).astype(jnp.int32)
    logp = jax.nn.log_softmax(x, axis=-1)
    valid = t != ignore_index
    t_safe = jnp.where(valid, t, 0)
    nll = -jnp.take_along_axis(logp, t_safe[:, None], axis=-1)[:, 0]
    w = jnp.asarray(class_weights, jnp.float32)[t_safe]
    num = jnp.sum(jnp.where(valid, w * nll, 0.0))
    den = jnp.sum(jnp.where(valid, w, 0.0))
    return num / den


if __name__ == "__main__":
    key = jax.random.PRNGKey(0)

    # module init: distribution -> weights = 1/d ; ignore_index
    distribution = [0.4, 0.3, 0.2, 0.1]          # 4 classes
    class_weights = [1.0 / d for d in distribution]
    ignore_index = -1

    # --- test 1: standard small shape (single tile, single chunk) ---
    N, C, H, W = 2, 4, 16, 16
    k1, k2, k3, k4, k5, k6 = jax.random.split(key, 6)
    logits = jax.random.normal(k1, (N, C, H, W), dtype=jnp.float32)
    target = jax.random.randint(k2, (N, H, W), 0, C, dtype=jnp.int32)
    ignore_mask = jax.random.bernoulli(k3, 0.1, (N, H, W))
    target = jnp.where(ignore_mask, ignore_index, target)

    loss = weighted_cross_entropy(logits, target, class_weights, ignore_index)
    jax.block_until_ready(loss)
    ref = _reference(logits, target, class_weights, ignore_index)
    assert jnp.allclose(loss, ref, rtol=1e-4, atol=1e-5), (loss, ref)

    # --- test 2: force multi-tile + megacore chunk split + ragged/OOB tiles ---
    H2 = W2 = 19   # HW=361 -> 3 tiles of 128 (ragged), 2 chunks of 2 (one fully OOB)
    logits2 = jax.random.normal(k4, (N, C, H2, W2), dtype=jnp.float32)
    target2 = jax.random.randint(k5, (N, H2, W2), 0, C, dtype=jnp.int32)
    ignore_mask2 = jax.random.bernoulli(k6, 0.1, (N, H2, W2))
    target2 = jnp.where(ignore_mask2, ignore_index, target2)

    loss2 = weighted_cross_entropy(logits2, target2, class_weights, ignore_index,
                                   max_tile=128)
    jax.block_until_ready(loss2)
    ref2 = _reference(logits2, target2, class_weights, ignore_index)
    assert jnp.allclose(loss2, ref2, rtol=1e-4, atol=1e-5), (loss2, ref2)

    print("KERNEL_OK")
</pallas_src>

<mosaic_0001>
module attributes {stable_mosaic.version = 11 : i64} {
  func.func @_wce_kernel(%arg0: i32, %arg1: i32, %arg2: i32, %arg3: memref<1x4x1xf32, #tpu.memory_space<vmem>>, %arg4: memref<1x4x256xf32, #tpu.memory_space<vmem>>, %arg5: memref<1x1x256xi32, #tpu.memory_space<vmem>>, %arg6: memref<1x1x256xf32, #tpu.memory_space<vmem>>, %arg7: memref<1x1x256xf32, #tpu.memory_space<vmem>>) attributes {dimension_semantics = [#tpu.dimension_semantics<parallel>, #tpu.dimension_semantics<parallel>, #tpu.dimension_semantics<arbitrary>], iteration_bounds = array<i64: 1, 2, 1>, scalar_prefetch = 0 : i64, scratch_operands = 0 : i64, tpu.core_type = #tpu.core_type<tc>, window_params = [{pipeline_mode = #tpu.pipeline_mode<synchronous>, transform_indices = @transform_0, window_bounds = array<i64: 1, 4, 1>}, {transform_indices = @transform_1, window_bounds = array<i64: 1, 4, 256>}, {transform_indices = @transform_2, window_bounds = array<i64: 1, 1, 256>}, {transform_indices = @transform_3, window_bounds = array<i64: 1, 1, 256>}, {transform_indices = @transform_4, window_bounds = array<i64: 1, 1, 256>}]} {
    %c0_i32 = arith.constant 0 : i32
    %0 = arith.cmpi eq, %arg2, %c0_i32 : i32
    %1 = arith.extui %0 : i1 to i32
    %c0_i32_0 = arith.constant 0 : i32
    %2 = arith.cmpi ne, %1, %c0_i32_0 : i32
    scf.if %2 {
      %cst_28 = arith.constant 0.000000e+00 : f32
      %42 = vector.broadcast %cst_28 : f32 to vector<1x1x256xf32>
      %c0_29 = arith.constant 0 : index
      %c0_30 = arith.constant 0 : index
      %c0_31 = arith.constant 0 : index
      %43 = vector.load %arg6[%c0_29, %c0_30, %c0_31] : memref<1x1x256xf32, #tpu.memory_space<vmem>>, vector<1x1x256xf32>
      tpu.vector_store %arg6[%c0_29, %c0_30, %c0_31], %42 {strides = array<i32>} : memref<1x1x256xf32, #tpu.memory_space<vmem>>, vector<1x1x256xf32>,
      %cst_32 = arith.constant 0.000000e+00 : f32
      %44 = vector.broadcast %cst_32 : f32 to vector<1x1x256xf32>
      %c0_33 = arith.constant 0 : index
      %c0_34 = arith.constant 0 : index
      %c0_35 = arith.constant 0 : index
      %45 = vector.load %arg7[%c0_33, %c0_34, %c0_35] : memref<1x1x256xf32, #tpu.memory_space<vmem>>, vector<1x1x256xf32>
      tpu.vector_store %arg7[%c0_33, %c0_34, %c0_35], %44 {strides = array<i32>} : memref<1x1x256xf32, #tpu.memory_space<vmem>>, vector<1x1x256xf32>,
    } else {
    }
    %c0 = arith.constant 0 : index
    %c0_1 = arith.constant 0 : index
    %c0_2 = arith.constant 0 : index
    %3 = vector.load %arg4[%c0, %c0_1, %c0_2] : memref<1x4x256xf32, #tpu.memory_space<vmem>>, vector<1x4x256xf32>
    %c0_3 = arith.constant 0 : index
    %c0_4 = arith.constant 0 : index
    %c0_5 = arith.constant 0 : index
    %4 = vector.load %arg5[%c0_3, %c0_4, %c0_5] : memref<1x1x256xi32, #tpu.memory_space<vmem>>, vector<1x1x256xi32>
    %c0_6 = arith.constant 0 : index
    %c0_7 = arith.constant 0 : index
    %c0_8 = arith.constant 0 : index
    %5 = vector.load %arg3[%c0_6, %c0_7, %c0_8] : memref<1x4x1xf32, #tpu.memory_space<vmem>>, vector<1x4x1xf32>
    %cst = arith.constant dense<0xFF800000> : vector<1x256xf32>
    %6 = vector.multi_reduction <maximumf>, %3, %cst [1] : vector<1x4x256xf32> to vector<1x256xf32>
    %7 = vector.shape_cast %6 : vector<1x256xf32> to vector<1x1x256xf32>
    %8 = vector.broadcast %7 : vector<1x1x256xf32> to vector<1x4x256xf32>
    %9 = arith.subf %3, %8 : vector<1x4x256xf32>
    %10 = math.exp %9 : vector<1x4x256xf32>
    %cst_9 = arith.constant dense<0.000000e+00> : vector<1x256xf32>
    %11 = vector.multi_reduction <add>, %10, %cst_9 [1] : vector<1x4x256xf32> to vector<1x256xf32>
    %12 = vector.shape_cast %11 : vector<1x256xf32> to vector<1x1x256xf32>
    %13 = math.log %12 : vector<1x1x256xf32>
    %14 = arith.addf %13, %7 : vector<1x1x256xf32>
    %15 = tpu.iota {dimensions = array<i32: 1>} : vector<1x4x256xi32>
    %16 = vector.broadcast %4 : vector<1x1x256xi32> to vector<1x4x256xi32>
    %17 = arith.cmpi eq, %15, %16 : vector<1x4x256xi32>
    %cst_10 = arith.constant 0.000000e+00 : f32
    %18 = vector.broadcast %cst_10 : f32 to vector<1x4x256xf32>
    %19 = arith.select %17, %3, %18 : vector<1x4x256xi1>, vector<1x4x256xf32>
    %cst_11 = arith.constant dense<0.000000e+00> : vector<1x256xf32>
    %20 = vector.multi_reduction <add>, %19, %cst_11 [1] : vector<1x4x256xf32> to vector<1x256xf32>
    %21 = vector.shape_cast %20 : vector<1x256xf32> to vector<1x1x256xf32>
    %cst_12 = arith.constant 0.000000e+00 : f32
    %22 = vector.shape_cast %5 : vector<1x4x1xf32> to vector<1x4x1xf32>
    %23 = vector.broadcast %22 : vector<1x4x1xf32> to vector<1x4x256xf32>
    %24 = vector.broadcast %cst_12 : f32 to vector<1x4x256xf32>
    %25 = arith.select %17, %23, %24 : vector<1x4x256xi1>, vector<1x4x256xf32>
    %cst_13 = arith.constant dense<0.000000e+00> : vector<1x256xf32>
    %26 = vector.multi_reduction <add>, %25, %cst_13 [1] : vector<1x4x256xf32> to vector<1x256xf32>
    %27 = vector.shape_cast %26 : vector<1x256xf32> to vector<1x1x256xf32>
    %28 = arith.subf %14, %21 : vector<1x1x256xf32>
    %c-1_i32 = arith.constant -1 : i32
    %29 = vector.broadcast %c-1_i32 : i32 to vector<1x1x256xi32>
    %30 = arith.cmpi ne, %4, %29 : vector<1x1x256xi32>
    %31 = arith.mulf %27, %28 : vector<1x1x256xf32>
    %cst_14 = arith.constant 0.000000e+00 : f32
    %32 = vector.broadcast %cst_14 : f32 to vector<1x1x256xf32>
    %33 = arith.select %30, %31, %32 : vector<1x1x256xi1>, vector<1x1x256xf32>
    %cst_15 = arith.constant 0.000000e+00 : f32
    %34 = vector.broadcast %cst_15 : f32 to vector<1x1x256xf32>
    %35 = arith.select %30, %27, %34 : vector<1x1x256xi1>, vector<1x1x256xf32>
    %c0_16 = arith.constant 0 : index
    %c0_17 = arith.constant 0 : index
    %c0_18 = arith.constant 0 : index
    %36 = vector.load %arg6[%c0_16, %c0_17, %c0_18] : memref<1x1x256xf32, #tpu.memory_space<vmem>>, vector<1x1x256xf32>
    %37 = arith.addf %36, %33 : vector<1x1x256xf32>
    %c0_19 = arith.constant 0 : index
    %c0_20 = arith.constant 0 : index
    %c0_21 = arith.constant 0 : index
    %38 = vector.load %arg6[%c0_19, %c0_20, %c0_21] : memref<1x1x256xf32, #tpu.memory_space<vmem>>, vector<1x1x256xf32>
    tpu.vector_store %arg6[%c0_19, %c0_20, %c0_21], %37 {strides = array<i32>} : memref<1x1x256xf32, #tpu.memory_space<vmem>>, vector<1x1x256xf32>,
    %c0_22 = arith.constant 0 : index
    %c0_23 = arith.constant 0 : index
    %c0_24 = arith.constant 0 : index
    %39 = vector.load %arg7[%c0_22, %c0_23, %c0_24] : memref<1x1x256xf32, #tpu.memory_space<vmem>>, vector<1x1x256xf32>
    %40 = arith.addf %39, %35 : vector<1x1x256xf32>
    %c0_25 = arith.constant 0 : index
    %c0_26 = arith.constant 0 : index
    %c0_27 = arith.constant 0 : index
    %41 = vector.load %arg7[%c0_25, %c0_26, %c0_27] : memref<1x1x256xf32, #tpu.memory_space<vmem>>, vector<1x1x256xf32>
    tpu.vector_store %arg7[%c0_25, %c0_26, %c0_27], %40 {strides = array<i32>} : memref<1x1x256xf32, #tpu.memory_space<vmem>>, vector<1x1x256xf32>,
    return
  }
  func.func @transform_0(%arg0: i32, %arg1: i32, %arg2: i32) -> (i32, i32, i32) {
    %c0_i32 = arith.constant 0 : i32
    %c0_i32_0 = arith.constant 0 : i32
    %c0_i32_1 = arith.constant 0 : i32
    %c0_i32_2 = arith.constant 0 : i32
    return %c0_i32, %c0_i32_0, %c0_i32_1 : i32, i32, i32
  }
  func.func @transform_1(%arg0: i32, %arg1: i32, %arg2: i32) -> (i32, i32, i32) {
    %c1_i32 = arith.constant 1 : i32
    %0 = arith.muli %arg0, %c1_i32 : i32
    %1 = arith.addi %0, %arg2 : i32
    %c0_i32 = arith.constant 0 : i32
    %c0_i32_0 = arith.constant 0 : i32
    return %arg1, %c0_i32, %1 : i32, i32, i32
  }
  func.func @transform_2(%arg0: i32, %arg1: i32, %arg2: i32) -> (i32, i32, i32) {
    %c1_i32 = arith.constant 1 : i32
    %0 = arith.muli %arg0, %c1_i32 : i32
    %1 = arith.addi %0, %arg2 : i32
    %c0_i32 = arith.constant 0 : i32
    %c0_i32_0 = arith.constant 0 : i32
    return %arg1, %c0_i32, %1 : i32, i32, i32
  }
  func.func @transform_3(%arg0: i32, %arg1: i32, %arg2: i32) -> (i32, i32, i32) {
    %c0_i32 = arith.constant 0 : i32
    %c0_i32_0 = arith.constant 0 : i32
    return %arg1, %arg0, %c0_i32 : i32, i32, i32
  }
  func.func @transform_4(%arg0: i32, %arg1: i32, %arg2: i32) -> (i32, i32, i32) {
    %c0_i32 = arith.constant 0 : i32
    %c0_i32_0 = arith.constant 0 : i32
    return %arg1, %arg0, %c0_i32 : i32, i32, i32
  }
}

</mosaic_0001>

<llo_original>
// kernel: tpu_custom_call.1
$region0: #{tpu_custom_call.1}
  #allocation0 [shape = 'u32[]', space=smem, size = 0x4, offset = 0x4, fixed_abs, tag = 'smem constant byte address 0x4 - core index']
  #allocation1 [shape = 'u32[144,128]{1,0:T(1,128)}', space=vmem, size = 0x12000, scoped, tag = 'internal scratch']
  %s0 = inlined_call_operand.vmem [shape: f32[1,4,1], index: 0, kind: input, shape index: {}]
  %s1 = inlined_call_operand.hbm [shape: f32[2,4,256], index: 1, kind: input, shape index: {}]
  %s2 = inlined_call_operand.vmem [shape: s32[2,1,256], index: 2, kind: input, shape index: {}]
  %s3 = inlined_call_operand.hbm [shape: f32[2,1,256], index: 3, kind: output, shape index: {0}]
  %s4 = inlined_call_operand.hbm [shape: f32[2,1,256], index: 4, kind: output, shape index: {1}]
  %5 = xla_tuple %s3, %s4
  %s6 = sld [smem:[#allocation0]]
  $region61: #{tpu_custom_call.1} parent=0
    _
  %s8 = ssub.s32 1, %s6
  %s9 = scalar_select 0, %s8, %s6
  $region1: #{tpu_custom_call.1} parent=0
    #allocation2 [shape = 'u8[8192]{0}', space=vmem, size = 0x2000, scoped, tag = 'input window, operand 1']
    #allocation3 [shape = 's32[2]{0}', space=sflag, size = 0x8, scoped, tag = 'scoped memory for tpu_custom_call.1']
    #allocation4 [shape = 's32[2]{0}', space=sflag, size = 0x8, scoped, tag = 'scoped memory for tpu_custom_call.1']
    #allocation5 [shape = 'u8[2048]{0}', space=vmem, size = 0x800, scoped, tag = 'output window, operand 0']
    #allocation6 [shape = 'u8[2048]{0}', space=vmem, size = 0x800, scoped, tag = 'output window, operand 1']
    #allocation7 [shape = 's32[2]{0}', space=sflag, size = 0x8, scoped, tag = 'scoped memory for tpu_custom_call.1']
    %10 = vsyncpa [#allocation3], 0
    %s11 = scalar_lea.sflag [#allocation3], 1
    %12 = vsyncpa %s11, 0
    %13 = vsyncpa [#allocation4], 0
    %s14 = scalar_lea.sflag [#allocation4], 1
    %15 = vsyncpa %s14, 0
    %16 = vsyncpa [#allocation7], 0
    %s17 = scalar_lea.sflag [#allocation7], 1
    %18 = vsyncpa %s17, 0
    loop: start=0, step=1, limit=4
    $region2: #{tpu_custom_call.1} parent=1 // loop_pre_header
      _
    $region3: #{tpu_custom_call.1} parent=1 // loop_header
      %s20 = sphi 0, %s24
      %p21 = scmp.ge.s32.totalorder %s20, 4
      %s27 = sphi 0, %s46
      %s28 = sphi 0, %s42
      %s29 = sphi 0, %s38
      %s30 = sphi 0, %s27
      %s31 = sphi 0, %s28
      %s32 = sphi 0, %s29
      %s33 = sphi 0, %s30
      %s34 = sphi 0, %s31
      %s35 = sphi 0, %s32
      %s47 = sphi 0, %s47
      %s49 = sphi 0, %s47
      %s50 = sphi 0, %s49
      %s64 = sphi 0, %s50
      %s74 = sphi 0, %s76
      %s77 = sphi 0, %s74
      %s78 = sphi 0, %s77
      %s94 = sphi 0, %s78
      %s104 = sphi 0, %s106
      %s107 = sphi 0, %s104
      %s108 = sphi 0, %s107
      %s124 = sphi 0, %s108
      %s132 = sphi 0, %s134
      %s135 = sphi 0, %s132
      %s136 = sphi 0, %s135
      %s152 = sphi 0, %s136
      %s160 = sphi 0, %s162
      %s163 = sphi 0, %s160
      %s164 = sphi 0, %s163
      %s180 = sphi 0, %s164
    $region4: #{tpu_custom_call.1} parent=1 // loop_header_branch
      %23 = sbr.rel (%p21) target = $region8
    $region5: #{tpu_custom_call.1} parent=1 // loop_body
      %s25 = ssub.s32 %s20, 1
      %s26 = ssub.s32 %s20, 2
      %s36 = sadd.s32 1, %s29
      %p37 = scmp.ge.s32.totalorder %s36, 1
      %s38 = scalar_select %p37, 0, %s36
      %s39 = sadd.s32 1, %s28
      %s40 = scalar_select %p37, %s39, %s28
      %p41 = scmp.ge.s32.totalorder %s40, 2
      %s42 = scalar_select %p41, 0, %s40
      %s43 = sadd.s32 1, %s27
      %s44 = scalar_select %p41, %s43, %s27
      %p45 = scmp.ge.s32.totalorder %s44, 1
      %s46 = scalar_select %p45, 0, %s44
      %s48 = sadd.s32 %s47, 1
      %p51 = scmp.eq.s32.totalorder %s20, 1
      %p52 = scmp.ne.s32.totalorder %s47, %s49
      %p53 = scmp.eq.s32.totalorder %s20, 0
      %p54 = por %p52, %p53
      %p55 = scmp.ne.s32.totalorder %s47, %s49
      %p56 = scmp.eq.s32.totalorder %s25, 1
      %p57 = por %p55, %p56
      %p58 = scmp.ne.s32.totalorder %s49, %s50
      %p59 = scmp.eq.s32.totalorder %s25, 0
      %p60 = por %p58, %p59
      %p61 = scmp.ne.s32.totalorder %s49, %s50
      %p62 = scmp.eq.s32.totalorder %s26, 1
      %p63 = por %p61, %p62
      %p65 = scmp.ne.s32.totalorder %s50, %s64
      %p66 = scmp.eq.s32.totalorder %s26, 0
      %p67 = por %p65, %p66
      %s68 = sadd.s32 %s27, %s29
      %s69 = sadd.s32 %s46, %s38
      %s70 = ssub.s32 %s28, %s42
      %s71 = ssub.s32 %s68, %s69
      %s72 = sor.u32 %s70, %s71
      %p73 = scmp.eq.s32.totalorder %s72, 0
      %s75 = sadd.s32 %s74, 1
      %s76 = scalar_select %p73, %s74, %s75
      %p79 = pneg %p73
      %p80 = scmp.eq.s32.totalorder %s20, 1
      %p81 = por %p79, %p80
      %p82 = scmp.ne.s32.totalorder %s74, %s77
      %p83 = scmp.eq.s32.totalorder %s20, 0
      %p84 = por %p82, %p83
      %p85 = scmp.ne.s32.totalorder %s74, %s77
      %p86 = scmp.eq.s32.totalorder %s25, 1
      %p87 = por %p85, %p86
      %p88 = scmp.ne.s32.totalorder %s77, %s78
      %p89 = scmp.eq.s32.totalorder %s25, 0
      %p90 = por %p88, %p89
      %p91 = scmp.ne.s32.totalorder %s77, %s78
      %p92 = scmp.eq.s32.totalorder %s26, 1
      %p93 = por %p91, %p92
      %p95 = scmp.ne.s32.totalorder %s78, %s94
      %p96 = scmp.eq.s32.totalorder %s26, 0
      %p97 = por %p95, %p96
      %s98 = sadd.s32 %s27, %s29
      %s99 = sadd.s32 %s46, %s38
      %s100 = ssub.s32 %s28, %s42
      %s101 = ssub.s32 %s98, %s99
      %s102 = sor.u32 %s100, %s101
      %p103 = scmp.eq.s32.totalorder %s102, 0
      %s105 = sadd.s32 %s104, 1
      %s106 = scalar_select %p103, %s104, %s105
      %p109 = pneg %p103
      %p110 = scmp.eq.s32.totalorder %s20, 1
      %p111 = por %p109, %p110
      %p112 = scmp.ne.s32.totalorder %s104, %s107
      %p113 = scmp.eq.s32.totalorder %s20, 0
      %p114 = por %p112, %p113
      %p115 = scmp.ne.s32.totalorder %s104, %s107
      %p116 = scmp.eq.s32.totalorder %s25, 1
      %p117 = por %p115, %p116
      %p118 = scmp.ne.s32.totalorder %s107, %s108
      %p119 = scmp.eq.s32.totalorder %s25, 0
      %p120 = por %p118, %p119
      %p121 = scmp.ne.s32.totalorder %s107, %s108
      %p122 = scmp.eq.s32.totalorder %s26, 1
      %p123 = por %p121, %p122
      %p125 = scmp.ne.s32.totalorder %s108, %s124
      %p126 = scmp.eq.s32.totalorder %s26, 0
      %p127 = por %p125, %p126
      %s128 = ssub.s32 %s28, %s42
      %s129 = ssub.s32 %s27, %s46
      %s130 = sor.u32 %s128, %s129
      %p131 = scmp.eq.s32.totalorder %s130, 0
      %s133 = sadd.s32 %s132, 1
      %s134 = scalar_select %p131, %s132, %s133
      %p137 = pneg %p131
      %p138 = scmp.eq.s32.totalorder %s20, 1
      %p139 = por %p137, %p138
      %p140 = scmp.ne.s32.totalorder %s132, %s135
      %p141 = scmp.eq.s32.totalorder %s20, 0
      %p142 = por %p140, %p141
      %p143 = scmp.ne.s32.totalorder %s132, %s135
      %p144 = scmp.eq.s32.totalorder %s25, 1
      %p145 = por %p143, %p144
      %p146 = scmp.ne.s32.totalorder %s135, %s136
      %p147 = scmp.eq.s32.totalorder %s25, 0
      %p148 = por %p146, %p147
      %p149 = scmp.ne.s32.totalorder %s135, %s136
      %p150 = scmp.eq.s32.totalorder %s26, 1
      %p151 = por %p149, %p150
      %p153 = scmp.ne.s32.totalorder %s136, %s152
      %p154 = scmp.eq.s32.totalorder %s26, 0
      %p155 = por %p153, %p154
      %s156 = ssub.s32 %s28, %s42
      %s157 = ssub.s32 %s27, %s46
      %s158 = sor.u32 %s156, %s157
      %p159 = scmp.eq.s32.totalorder %s158, 0
      %s161 = sadd.s32 %s160, 1
      %s162 = scalar_select %p159, %s160, %s161
      %p165 = pneg %p159
      %p166 = scmp.eq.s32.totalorder %s20, 1
      %p167 = por %p165, %p166
      %p168 = scmp.ne.s32.totalorder %s160, %s163
      %p169 = scmp.eq.s32.totalorder %s20, 0
      %p170 = por %p168, %p169
      %p171 = scmp.ne.s32.totalorder %s160, %s163
      %p172 = scmp.eq.s32.totalorder %s25, 1
      %p173 = por %p171, %p172
      %p174 = scmp.ne.s32.totalorder %s163, %s164
      %p175 = scmp.eq.s32.totalorder %s25, 0
      %p176 = por %p174, %p175
      %p177 = scmp.ne.s32.totalorder %s163, %s164
      %p178 = scmp.eq.s32.totalorder %s26, 1
      %p179 = por %p177, %p178
      %p181 = scmp.ne.s32.totalorder %s164, %s180
      %p182 = scmp.eq.s32.totalorder %s26, 0
      %p183 = por %p181, %p182
      %p184 = scmp.le.s32.totalorder 1, %s20
      %p185 = scmp.lt.s32.totalorder %s20, 3
      %p186 = pnand %p184, %p185
      %p187 = pneg %p186
      // Predicated region
      $region9: #{tpu_custom_call.1} parent=5 // pred_check
        _
      $region10: #{tpu_custom_call.1} parent=5 // pred_check_branch
        %189 = sbr.rel (%p186) target = $region12
      $region11: #{tpu_custom_call.1} parent=5 // pred_region
        %s190 = ssub.s32 %s20, 1
        // Predicated region
        $region13: #{tpu_custom_call.1} parent=11 // pred_check
          %p191 = pneg %p60
        $region14: #{tpu_custom_call.1} parent=11 // pred_check_branch
          %193 = sbr.rel (%p191) target = $region16
        $region15: #{tpu_custom_call.1} parent=11 // pred_region
          _
        $region16: #{tpu_custom_call.1} parent=11 // pred_fallthru
          _
      $region12: #{tpu_custom_call.1} parent=5 // pred_fallthru
        _
      %p194 = scmp.lt.s32.totalorder %s20, 2
      // Predicated region
      $region17: #{tpu_custom_call.1} parent=5 // pred_check
        %p195 = pneg %p194
      $region18: #{tpu_custom_call.1} parent=5 // pred_check_branch
        %197 = sbr.rel (%p195) target = $region20
      $region19: #{tpu_custom_call.1} parent=5 // pred_region
        // Predicated region
        $region21: #{tpu_custom_call.1} parent=19 // pred_check
          %p198 = pneg %p84
        $region22: #{tpu_custom_call.1} parent=19 // pred_check_branch
          %200 = sbr.rel (%p198) target = $region24
        $region23: #{tpu_custom_call.1} parent=19 // pred_region
          %s201 = sand.u32 %s74, 1
          %s202 = scalar_lea.sflag [#allocation3], %s201
          %s203 = sand.u32 %s74, 1
          %s204 = smul.addr %s203, 8
          %s205 = scalar_lea.vmem [#allocation2], %s204
          %s206 = sadd.s32 %s27, %s29
          %s207 = smul.u32 2, %s206
          %s209 = ssub.s32 128, 128
          %210 = vsyncadd %s202, %s209
          %s211 = smul.addr %s28, 2
          %s212 = sadd.s32 %s207, %s211
          %s213 = smul.addr %s212, 64
          %s214 = scalar_lea.hbm %s1, %s213
          %s216 = sshll.u32 %s205, 4
          %s217 = int_to_ptr.vmem [resolvable:$true] %s216
          %219 = dma.hbm_to_vmem [thread:$0]  %s214, 128, %s217, %s202
        $region24: #{tpu_custom_call.1} parent=19 // pred_fallthru
          _
        // Predicated region
        $region25: #{tpu_custom_call.1} parent=19 // pred_check
          %p220 = pneg %p114
        $region26: #{tpu_custom_call.1} parent=19 // pred_check_branch
          %222 = sbr.rel (%p220) target = $region28
        $region27: #{tpu_custom_call.1} parent=19 // pred_region
          %s223 = sadd.s32 %s27, %s29
          %s224 = smul.u32 2, %s223
          %p225 = scmp.lt.s32.totalorder %s28, 1
          %s226 = scalar_select %p225, %s28, 1
          %p227 = scmp.lt.s32.totalorder %s224, 1
          %s228 = scalar_select %p227, %s224, 1
          %s229 = smul.addr %s226, 2
          %s230 = sadd.s32 %s228, %s229
          %s231 = scalar_lea.vmem %s2, %s230
          %s232 = sadd.s32 %s27, %s29
          %s233 = smul.u32 2, %s232
        $region28: #{tpu_custom_call.1} parent=19 // pred_fallthru
          _
      $region20: #{tpu_custom_call.1} parent=5 // pred_fallthru
        _
      %p234 = scmp.le.s32.totalorder 1, %s20
      %p235 = scmp.lt.s32.totalorder %s20, 3
      %p236 = pnand %p234, %p235
      %p237 = pneg %p236
      // Predicated region
      $region29: #{tpu_custom_call.1} parent=5 // pred_check
        _
      $region30: #{tpu_custom_call.1} parent=5 // pred_check_branch
        %239 = sbr.rel (%p236) target = $region32
      $region31: #{tpu_custom_call.1} parent=5 // pred_region
        %s240 = ssub.s32 %s20, 1
        %s241 = sand.u32 %s77, 1
        %s242 = scalar_lea.sflag [#allocation3], %s241
        %s243 = sand.u32 %s77, 1
        %s244 = smul.addr %s243, 8
        %s245 = scalar_lea.vmem [#allocation2], %s244
        // Predicated region
        $region33: #{tpu_custom_call.1} parent=31 // pred_check
          %p246 = pneg %p90
        $region34: #{tpu_custom_call.1} parent=31 // pred_check_branch
          %248 = sbr.rel (%p246) target = $region36
        $region35: #{tpu_custom_call.1} parent=31 // pred_region
          %249 = dma.done %s242, 128
        $region36: #{tpu_custom_call.1} parent=31 // pred_fallthru
          _
        %p250 = pneg %p60
        %p251 = pneg %p57
        %s252 = sand.u32 %s77, 1
        %s253 = scalar_lea.sflag [#allocation3], %s252
        %s254 = sand.u32 %s77, 1
        %s255 = smul.addr %s254, 8
        %s256 = scalar_lea.vmem [#allocation2], %s255
        %p257 = pneg %p90
        %p258 = pneg %p87
        %s259 = sadd.s32 %s30, %s32
        %s260 = smul.u32 2, %s259
        %p261 = scmp.lt.s32.totalorder %s31, 1
        %s262 = scalar_select %p261, %s31, 1
        %p263 = scmp.lt.s32.totalorder %s260, 1
        %s264 = scalar_select %p263, %s260, 1
        %s265 = smul.addr %s262, 2
        %s266 = sadd.s32 %s264, %s265
        %s267 = scalar_lea.vmem %s2, %s266
        %p268 = pneg %p120
        %p269 = pneg %p117
        %p270 = pneg %p148
        %p271 = pneg %p145
        %s272 = sand.u32 %s135, 1
        %s273 = scalar_lea.sflag [#allocation4], %s272
        %s274 = sand.u32 %s135, 1
        %s275 = smul.addr %s274, 2
        %s276 = scalar_lea.vmem [#allocation5], %s275
        %p277 = pneg %p176
        %p278 = pneg %p173
        %s279 = sand.u32 %s163, 1
        %s280 = scalar_lea.sflag [#allocation7], %s279
        %s281 = sand.u32 %s163, 1
        %s282 = smul.addr %s281, 2
        %s283 = scalar_lea.vmem [#allocation6], %s282
        %s284 = sadd.s32 %s30, %s32
        %s285 = smul.u32 2, %s284
        %s286 = sadd.s32 %s30, %s32
        %s287 = smul.u32 2, %s286
        %p288 = scmp.lt.s32.totalorder %s31, 1
        %s289 = scalar_select %p288, %s31, 1
        %p290 = scmp.lt.s32.totalorder %s287, 1
        %s291 = scalar_select %p290, %s287, 1
        %s292 = smul.addr %s289, 2
        %s293 = sadd.s32 %s291, %s292
        %s294 = scalar_lea.vmem %s2, %s293
        %s295 = sadd.s32 %s30, %s32
        %s296 = smul.u32 2, %s295
        %p297 = scmp.eq.s32.totalorder %s32, 0
        // Predicated region
        $region37: #{tpu_custom_call.1} parent=31 // pred_check
          %p298 = pneg %p297
        $region38: #{tpu_custom_call.1} parent=31 // pred_check_branch
          %300 = sbr.rel (%p298) target = $region40
        $region39: #{tpu_custom_call.1} parent=31 // pred_region
          %v301 = vlaneseq
          %vm302 = vcmp.ge.s32.totalorder %v301, 0
          %vm303 = vcmp.lt.s32.totalorder %v301, 256
          %vm304 = vmand %vm302, %vm303
          %305 = vst.msk [vmem:[%s276] sm:$0x3] %vm304, 0.0
          %306 = vst.msk [vmem:[%s283] sm:$0x3] %vm304, 0.0
        $region40: #{tpu_custom_call.1} parent=31 // pred_fallthru
          _
        %v307 = vld [vmem:[%s245] sm:$0xff]
        %v308 = vld [vmem:[%s294] sm:$0x3]
        %v309 = vld [vmem:[%s0] sm:$0xf]
        %v311 = vcombine.high %v307, %v307
        %vm313 = vcmask 1043456
        %v314 = vsel %vm313, %v307, -inf
        %v315 = vrot.slane %v314, 4
        %v316 = vmax.f32 %v314, %v315
        %v317 = vrot.slane %v316, 2
        %v318 = vmax.f32 %v316, %v317
        %v319 = vrot.slane %v318, 1
        %v320 = vmax.f32 %v318, %v319
        %v321 = vsel %vm313, %v311, -inf
        %v322 = vrot.slane %v321, 4
        %v323 = vmax.f32 %v321, %v322
        %v324 = vrot.slane %v323, 2
        %v325 = vmax.f32 %v323, %v324
        %v326 = vrot.slane %v325, 1
        %v327 = vmax.f32 %v325, %v326
        %v330 = vcombine.low %v320, %v327
        %v332 = vsub.f32 %v307, %v330
        %v333 = vmul.f32 %v332, 1.442695
        %v334 = vpow.pop %v333
        %v336 = vcombine.high %v334, %v334
        %v338 = vsel %vm313, %v334, 0.0
        %v339 = vrot.slane %v338, 4
        %v340 = vadd.f32 %v338, %v339
        %v341 = vrot.slane %v340, 2
        %v342 = vadd.f32 %v340, %v341
        %v343 = vrot.slane %v342, 1
        %v344 = vadd.f32 %v342, %v343
        %v345 = vsel %vm313, %v336, 0.0
        %v346 = vrot.slane %v345, 4
        %v347 = vadd.f32 %v345, %v346
        %v348 = vrot.slane %v347, 2
        %v349 = vadd.f32 %v347, %v348
        %v350 = vrot.slane %v349, 1
        %v351 = vadd.f32 %v349, %v350
        %v352 = vlog2.pop %v344
        %v353 = vmul.f32 %v352, 0.6931472
        %v354 = vlog2.pop %v351
        %v355 = vmul.f32 %v354, 0.6931472
        %v356 = vadd.f32 %v353, %v320
        %v357 = vadd.f32 %v355, %v327
        %v358 = vlaneseq
        %v359 = vshrl.u32 %v358, 7
        %v360 = vlaneseq
        %v361 = vshrl.u32 %v360, 7
        %v362 = vsub.s32 0, %v361
        %v363 = vrot.slane %v308, %v362
        %v364 = vlaneseq
        %v365 = vshrl.u32 %v364, 7
        %v366 = vsub.s32 1, %v365
        %v367 = vrot.slane %v308, %v366
        %vm368 = vcmp.eq.s32.totalorder %v359, %v363
        %vm369 = vcmp.eq.s32.totalorder %v359, %v367
        %v370 = vsel %vm368, %v307, 0.0
        %v371 = vsel %vm369, %v311, 0.0
        %v372 = vsel %vm313, %v370, 0.0
        %v373 = vrot.slane %v372, 4
        %v374 = vadd.f32 %v372, %v373
        %v375 = vrot.slane %v374, 2
        %v376 = vadd.f32 %v374, %v375
        %v377 = vrot.slane %v376, 1
        %v378 = vadd.f32 %v376, %v377
        %v379 = vsel %vm313, %v371, 0.0
        %v380 = vrot.slane %v379, 4
        %v381 = vadd.f32 %v379, %v380
        %v382 = vrot.slane %v381, 2
        %v383 = vadd.f32 %v381, %v382
        %v384 = vrot.slane %v383, 1
        %v385 = vadd.f32 %v383, %v384
        %387 = vset.pattern.permute.xlu0 0
        %388 = vperm.xlu0 %387, %v309
        %v389 = vpop.permute.xlu0 %388
        %v391 = vsel %vm368, %v389, 0.0
        %v392 = vsel %vm369, %v389, 0.0
        %v393 = vsel %vm313, %v391, 0.0
        %v394 = vrot.slane %v393, 4
        %v395 = vadd.f32 %v393, %v394
        %v396 = vrot.slane %v395, 2
        %v397 = vadd.f32 %v395, %v396
        %v398 = vrot.slane %v397, 1
        %v399 = vadd.f32 %v397, %v398
        %v400 = vsel %vm313, %v392, 0.0
        %v401 = vrot.slane %v400, 4
        %v402 = vadd.f32 %v400, %v401
        %v403 = vrot.slane %v402, 2
        %v404 = vadd.f32 %v402, %v403
        %v405 = vrot.slane %v404, 1
        %v406 = vadd.f32 %v404, %v405
        %v407 = vsub.f32 %v356, %v378
        %v408 = vsub.f32 %v357, %v385
        %vm409 = vcmp.ne.s32.totalorder %v308, 4294967295
        %v410 = vmul.f32 %v399, %v407
        %v411 = vmul.f32 %v406, %v408
        %v414 = vcombine.low %v410, %v411
        %v416 = vunpack.c.l.s4 1966171168
        %v417 = vunpack.c.0.s8 %v416
        %v418 = vlaneseq
        %v419 = vshrl.u32 %v418, 7
        %v420 = vsub.s32 %v417, %v419
        %v421 = vrot.slane %v414, %v420
        %v423 = vunpack.c.l.s4 1966171168
        %v424 = vunpack.c.0.s8 %v423
        %v425 = vlaneseq
        %v426 = vshrl.u32 %v425, 7
        %v427 = vsub.s32 %v424, %v426
        %v428 = vrot.slane %v421, %v427
        %v430 = vsel %vm409, %v428, 0.0
        %v433 = vcombine.low %v399, %v406
        %v435 = vunpack.c.l.s4 1966171168
        %v436 = vunpack.c.0.s8 %v435
        %v437 = vlaneseq
        %v438 = vshrl.u32 %v437, 7
        %v439 = vsub.s32 %v436, %v438
        %v440 = vrot.slane %v433, %v439
        %v442 = vunpack.c.l.s4 1966171168
        %v443 = vunpack.c.0.s8 %v442
        %v444 = vlaneseq
        %v445 = vshrl.u32 %v444, 7
        %v446 = vsub.s32 %v443, %v445
        %v447 = vrot.slane %v440, %v446
        %v449 = vsel %vm409, %v447, 0.0
        %v450 = vld [vmem:[%s276] sm:$0x3]
        %v451 = vadd.f32 %v450, %v430
        %v452 = vlaneseq
        %vm453 = vcmp.ge.s32.totalorder %v452, 0
        %vm454 = vcmp.lt.s32.totalorder %v452, 256
        %vm455 = vmand %vm453, %vm454
        %456 = vst.msk [vmem:[%s276] sm:$0x3] %vm455, %v451
        %v457 = vld [vmem:[%s283] sm:$0x3]
        %v458 = vadd.f32 %v457, %v449
        %459 = vst.msk [vmem:[%s283] sm:$0x3] %vm455, %v458
        %s460 = sand.u32 %s135, 1
        %s461 = scalar_lea.sflag [#allocation4], %s460
        %s462 = sand.u32 %s135, 1
        %s463 = smul.addr %s462, 2
        %s464 = scalar_lea.vmem [#allocation5], %s463
        %s465 = sand.u32 %s163, 1
        %s466 = scalar_lea.sflag [#allocation7], %s465
        %s467 = sand.u32 %s163, 1
        %s468 = smul.addr %s467, 2
        %s469 = scalar_lea.vmem [#allocation6], %s468
        // Predicated region
        $region41: #{tpu_custom_call.1} parent=31 // pred_check
          %p470 = pneg %p145
        $region42: #{tpu_custom_call.1} parent=31 // pred_check_branch
          %472 = sbr.rel (%p470) target = $region44
        $region43: #{tpu_custom_call.1} parent=31 // pred_region
          %s474 = ssub.s32 32, 32
          %475 = vsyncadd %s461, %s474
          %s476 = smul.addr %s30, 2
          %s477 = smul.addr %s31, 2
          %s478 = sadd.s32 %s476, %s477
          %s479 = smul.addr %s478, 16
          %s480 = scalar_lea.hbm %s3, %s479
          %s482 = sshll.u32 %s464, 4
          %s483 = int_to_ptr.vmem [resolvable:$true] %s482
          %485 = dma.vmem_to_hbm [thread:$0]  %s483, 32, %s480, %s461
        $region44: #{tpu_custom_call.1} parent=31 // pred_fallthru
          _
        // Predicated region
        $region45: #{tpu_custom_call.1} parent=31 // pred_check
          %p486 = pneg %p173
        $region46: #{tpu_custom_call.1} parent=31 // pred_check_branch
          %488 = sbr.rel (%p486) target = $region48
        $region47: #{tpu_custom_call.1} parent=31 // pred_region
          %s490 = ssub.s32 32, 32
          %491 = vsyncadd %s466, %s490
          %s492 = smul.addr %s30, 2
          %s493 = smul.addr %s31, 2
          %s494 = sadd.s32 %s492, %s493
          %s495 = smul.addr %s494, 16
          %s496 = scalar_lea.hbm %s4, %s495
          %s498 = sshll.u32 %s469, 4
          %s499 = int_to_ptr.vmem [resolvable:$true] %s498
          %501 = dma.vmem_to_hbm [thread:$0]  %s499, 32, %s496, %s466
        $region48: #{tpu_custom_call.1} parent=31 // pred_fallthru
          _
      $region32: #{tpu_custom_call.1} parent=5 // pred_fallthru
        _
      %p502 = scmp.le.s32.totalorder 2, %s20
      // Predicated region
      $region49: #{tpu_custom_call.1} parent=5 // pred_check
        %p503 = pneg %p502
      $region50: #{tpu_custom_call.1} parent=5 // pred_check_branch
        %505 = sbr.rel (%p503) target = $region52
      $region51: #{tpu_custom_call.1} parent=5 // pred_region
        %s506 = ssub.s32 %s20, 2
        // Predicated region
        $region53: #{tpu_custom_call.1} parent=51 // pred_check
          %p507 = pneg %p151
        $region54: #{tpu_custom_call.1} parent=51 // pred_check_branch
          %509 = sbr.rel (%p507) target = $region56
        $region55: #{tpu_custom_call.1} parent=51 // pred_region
          %s510 = sand.u32 %s136, 1
          %s511 = scalar_lea.sflag [#allocation4], %s510
          %s512 = sand.u32 %s136, 1
          %s513 = smul.addr %s512, 2
          %s514 = scalar_lea.vmem [#allocation5], %s513
          %515 = dma.done %s511, 32
        $region56: #{tpu_custom_call.1} parent=51 // pred_fallthru
          _
        // Predicated region
        $region57: #{tpu_custom_call.1} parent=51 // pred_check
          %p516 = pneg %p179
        $region58: #{tpu_custom_call.1} parent=51 // pred_check_branch
          %518 = sbr.rel (%p516) target = $region60
        $region59: #{tpu_custom_call.1} parent=51 // pred_region
          %s519 = sand.u32 %s164, 1
          %s520 = scalar_lea.sflag [#allocation7], %s519
          %s521 = sand.u32 %s164, 1
          %s522 = smul.addr %s521, 2
          %s523 = scalar_lea.vmem [#allocation6], %s522
          %524 = dma.done %s520, 32
        $region60: #{tpu_custom_call.1} parent=51 // pred_fallthru
          _
      $region52: #{tpu_custom_call.1} parent=5 // pred_fallthru
        _
    $region6: #{tpu_custom_call.1} parent=1 // loop_footer
      %s24 = sadd.s32 1, %s20
    $region7: #{tpu_custom_call.1} parent=1 // loop_footer_branch
      %19 = sbr.rel target = $region3
    $region8: #{tpu_custom_call.1} parent=1 // loop_exit
      _
    %525 = vsyncpa [#allocation3], 1
    %s526 = scalar_lea.sflag [#allocation3], 1
    %527 = vsyncpa %s526, 1
    %528 = vsyncpa [#allocation4], 1
    %s529 = scalar_lea.sflag [#allocation4], 1
    %530 = vsyncpa %s529, 1
    %531 = vsyncpa [#allocation7], 1
    %s532 = scalar_lea.sflag [#allocation7], 1
    %533 = vsyncpa %s532, 1

</llo_original>
